<compile_context>
chip_gen: v6e
topology: v6e:2x2x1
jax: 0.10.0
libtpu: 0.0.40
codegen_flags: <defaults>
</compile_context>

<pallas_src>
import functools

import jax
import jax.numpy as jnp
from jax import lax
from jax.experimental import pallas as pl
from jax.experimental.pallas import tpu as pltpu


_MiB = 1024 * 1024


def _maybe_vmem_limit(nbytes):
    """Raise the scoped-VMEM limit above the cross-gen default only when needed."""
    if nbytes <= 32 * _MiB:
        return None
    # TODO(synk): column-tile the fused weight instead when this exceeds v7x's
    # 64 MiB physical VMEM (very large embed sizes).
    return int(min(nbytes, 128 * _MiB))


def _default_block(seq_len):
    """256 feeds the 2x256x256 MXU on v6e/v7x; 128 on v5e (4x128x128 MXU)."""
    blk = 128
    try:
        kind = jax.devices()[0].device_kind.lower()
        if ("v6" in kind) or ("v7" in kind):
            blk = 256
    except Exception:
        pass
    return min(blk, seq_len)


# ---------------------------------------------------------------------------
# Phase 1: fused QKV projection  (one wide x @ [E, 3E] matmul per tile)
# ---------------------------------------------------------------------------
def _qkv_proj_kernel(x_ref, w_ref, b_ref, q_ref, k_ref, v_ref):
    x = x_ref[...]                                            # (TL, E)
    qkv = jnp.dot(x, w_ref[...], preferred_element_type=jnp.float32)
    qkv = qkv + b_ref[...]                                    # (TL, 3E), f32 accum
    E = q_ref.shape[-1]
    q_ref[...] = qkv[:, 0 * E:1 * E].astype(q_ref.dtype)
    k_ref[...] = qkv[:, 1 * E:2 * E].astype(k_ref.dtype)
    v_ref[...] = qkv[:, 2 * E:3 * E].astype(v_ref.dtype)


def _qkv_projection(x, w_qkv, b_qkv, *, tile_l, out_dtype):
    B, L, E = x.shape
    n_l = L // tile_l
    o_item = jnp.dtype(out_dtype).itemsize
    # The weight's index_map is constant -> DMA'd once and resident, but Pallas
    # still allocates 2 buffers for it; size the scoped-VMEM limit accordingly.
    # TODO(synk): single-buffer (pipeline_mode=pl.Buffered(1)) / column-tile the
    # [E, 3E] weight for very large E so it fits v7x's 64 MiB physical VMEM.
    vmem_need = (
        2 * E * 3 * E * jnp.dtype(w_qkv.dtype).itemsize   # fused weight x2 buffers
        + 2 * 3 * E * 4                                   # fused bias (f32)
        + 2 * tile_l * E * jnp.dtype(x.dtype).itemsize    # x tile
        + 3 * 2 * tile_l * E * o_item                     # q/k/v output tiles
        + tile_l * 3 * E * 4)                             # f32 qkv intermediate
    spec_lt = pl.BlockSpec((None, tile_l, E), lambda b, i: (b, i, 0))
    return pl.pallas_call(
        _qkv_proj_kernel,
        out_shape=tuple(jax.ShapeDtypeStruct((B, L, E), out_dtype)
                        for _ in range(3)),
        grid_spec=pltpu.PrefetchScalarGridSpec(
            num_scalar_prefetch=0,
            grid=(B, n_l),
            in_specs=[
                spec_lt,                                         # x tile
                pl.BlockSpec((E, 3 * E), lambda b, i: (0, 0)),   # fused weight
                pl.BlockSpec((1, 3 * E), lambda b, i: (0, 0)),   # fused bias
            ],
            out_specs=[spec_lt, spec_lt, spec_lt],
        ),
        compiler_params=pltpu.CompilerParams(
            dimension_semantics=("parallel", "parallel"),
            vmem_limit_bytes=_maybe_vmem_limit(2 * vmem_need)),
    )(x, w_qkv, b_qkv)


# ---------------------------------------------------------------------------
# Phase 2: banded flash attention over (batch, q-tile, band-kv-tile)
# ---------------------------------------------------------------------------
def _local_attn_kernel(window, tq, tk, seq_len,
                       q_ref, k_ref, v_ref, o_ref, m_sc, l_sc, acc_sc):
    qi = pl.program_id(1)
    j = pl.program_id(2)

    E = q_ref.shape[-1]
    scale = 1.0 / (E ** 0.5)

    # kv tile mapped to this grid step — MUST stay in lockstep with kv_map().
    q_start = qi * tq
    kv_first = jnp.maximum(q_start - window, 0) // tk
    kv_last = jnp.minimum(q_start + tq - 1 + window, seq_len - 1) // tk
    kv_blk = jnp.minimum(kv_first + j, kv_last)
    col_start = kv_blk * tk

    @pl.when(j == 0)
    def _():
        m_sc[...] = jnp.full((tq, 1), -jnp.inf, dtype=jnp.float32)
        l_sc[...] = jnp.zeros((tq, 1), dtype=jnp.float32)
        acc_sc[...] = jnp.zeros((tq, E), dtype=jnp.float32)

    # Padding band steps (kv index clamped to kv_last => their DMA was skipped
    # because the block index repeats): skip all compute too.
    active = (kv_first + j) <= kv_last

    # Tile fully inside the band -> no mask work at all.
    row_lo, row_hi = q_start, q_start + tq - 1
    col_lo, col_hi = col_start, col_start + tk - 1
    fully_inside = ((jnp.abs(row_hi - col_lo) <= window) &
                    (jnp.abs(col_hi - row_lo) <= window))

    def flash_update(apply_mask):
        q = q_ref[...]
        k = k_ref[...]
        v = v_ref[...]
        # q @ k^T without an explicit transpose: contract last dims on the MXU.
        s = lax.dot_general(q, k, (((1,), (1,)), ((), ())),
                            preferred_element_type=jnp.float32) * scale
        if apply_mask:
            row = q_start + lax.broadcasted_iota(jnp.int32, (tq, tk), 0)
            col = col_start + lax.broadcasted_iota(jnp.int32, (tq, tk), 1)
            in_band = jnp.abs(row - col) <= window
            # Finite large-negative (not -inf): fully masked rows stay NaN-free.
            s = jnp.where(in_band, s, -1e30)
        m_prev = m_sc[...]
        m_new = jnp.maximum(m_prev, jnp.max(s, axis=-1, keepdims=True))
        alpha = jnp.exp(m_prev - m_new)
        p = jnp.exp(s - m_new)
        if apply_mask:
            # Zero masked probabilities so fully-masked rows never accumulate
            # garbage into l/acc (robust to any band-tile ordering).
            p = jnp.where(in_band, p, 0.0)
        l_sc[...] = alpha * l_sc[...] + jnp.sum(p, axis=-1, keepdims=True)
        acc_sc[...] = alpha * acc_sc[...] + jnp.dot(
            p.astype(v.dtype), v, preferred_element_type=jnp.float32)
        m_sc[...] = m_new

    @pl.when(active & fully_inside)
    def _():
        flash_update(apply_mask=False)

    @pl.when(active & jnp.logical_not(fully_inside))
    def _():
        flash_update(apply_mask=True)

    @pl.when(j == pl.num_programs(2) - 1)
    def _():
        # Exact divide (one op per output tile) for parity with the reference.
        o_ref[...] = (acc_sc[...] / l_sc[...]).astype(o_ref.dtype)


def fuse_qkv_params(wq, bq, wk, bk, wv, bv, *, param_dtype=jnp.bfloat16):
    """Pre-fuse the three Linear layers into one [E,3E] weight / [1,3E] bias.

    Call ONCE at parameter-prep time (hoisted out of the per-forward path).
    Weights are expected PRE-TRANSPOSED as [E_in, E_out]; biases as [1, E].
    The MXU is bf16-native on v5e/v6e/v7x, so bf16 operands are the default;
    accumulation inside the kernels is always f32.
    """
    w_qkv = jnp.concatenate([wq, wk, wv], axis=1).astype(param_dtype)   # (E, 3E)
    b_qkv = jnp.concatenate([bq, bk, bv], axis=1).astype(jnp.float32)   # (1, 3E)
    return w_qkv, b_qkv


def local_attention(x, w_qkv, b_qkv, *, window_size, compute_dtype=None,
                    block_q=None, block_kv=None):
    """x: [B, L, E]; w_qkv: [E, 3E] fused pre-transposed weight; b_qkv: [1, 3E].

    compute_dtype: dtype of the MXU operands (defaults to w_qkv.dtype, i.e. bf16
    when params come from fuse_qkv_params).  Output keeps x.dtype.
    """
    B, L, E = x.shape
    cdt = compute_dtype if compute_dtype is not None else w_qkv.dtype

    # Tile sizes (per-generation default; bounded so tiles + f32 accumulator fit
    # comfortably under v7x's 64 MiB VMEM).
    tq = block_q if block_q is not None else _default_block(L)
    tk = block_kv if block_kv is not None else tq
    assert L % tq == 0 and L % tk == 0 and tq % tk == 0, \
        "sequence length must divide the tile sizes"
    # TODO(synk): pad L up to a multiple of the tile size for ragged lengths.
    # TODO(synk): pad E up to a multiple of 128 (lane width) for lane-dense
    # stores when the embed size is small.
    # TODO(synk): on v5e, fold the Q projection into the attention kernel to
    # save one full [B, L, E] HBM round-trip for q.

    q, k, v = _qkv_projection(x.astype(cdt), w_qkv.astype(cdt), b_qkv,
                              tile_l=tq, out_dtype=cdt)

    n_q = L // tq
    n_kv = L // tk
    # Tight worst-case number of kv tiles intersecting one q tile's band
    # (q_start is tile-aligned, so the band-start misalignment is fixed).
    off = (tk - window_size % tk) % tk
    n_band = min(n_kv, (off + tq + 2 * window_size - 1) // tk + 1)

    kernel = functools.partial(_local_attn_kernel, window_size, tq, tk, L)

    def q_map(b, qi, j):
        return (b, qi, 0)

    def kv_map(b, qi, j):
        # MUST stay in lockstep with the kv_blk computation inside the kernel.
        q_start = qi * tq
        first = jnp.maximum(q_start - window_size, 0) // tk
        last = jnp.minimum(q_start + tq - 1 + window_size, L - 1) // tk
        # Clamp to the q tile's LAST in-band tile: padding band steps repeat the
        # previous block index, so Pallas skips their K/V DMAs entirely.
        return (b, jnp.minimum(first + j, last), 0)

    c_item = jnp.dtype(cdt).itemsize
    vmem_need = (2 * tq * E * c_item                         # q tile (x2 buffers)
                 + 2 * 2 * tk * E * c_item                   # k, v tiles
                 + 2 * tq * E * jnp.dtype(x.dtype).itemsize  # out tile
                 + tq * E * 4 + 2 * tq * 4                   # acc + m + l scratch
                 + 2 * tq * tk * 4)                          # scores/probs temps

    # v7x has 2 TensorCores: keep the "parallel" extent B * n_q >= 2 so both
    # cores get work.
    return pl.pallas_call(
        kernel,
        out_shape=jax.ShapeDtypeStruct((B, L, E), x.dtype),
        grid_spec=pltpu.PrefetchScalarGridSpec(
            num_scalar_prefetch=0,
            grid=(B, n_q, n_band),
            in_specs=[
                pl.BlockSpec((None, tq, E), q_map),   # q tile
                pl.BlockSpec((None, tk, E), kv_map),  # k tile (band only)
                pl.BlockSpec((None, tk, E), kv_map),  # v tile (band only)
                # TODO(synk): pipeline_mode=pl.Buffered(3) on k/v if profiling
                # shows exposed DMA at the start of each short band loop.
            ],
            out_specs=pl.BlockSpec((None, tq, E), q_map),
            scratch_shapes=[
                pltpu.VMEM((tq, 1), jnp.float32),     # m (running max)
                pltpu.VMEM((tq, 1), jnp.float32),     # l (running denom)
                pltpu.VMEM((tq, E), jnp.float32),     # acc
            ],
        ),
        compiler_params=pltpu.CompilerParams(
            dimension_semantics=("parallel", "parallel", "arbitrary"),
            vmem_limit_bytes=_maybe_vmem_limit(2 * vmem_need)),
    )(q, k, v)


def _reference_local_attention(x, wq, bq, wk, bk, wv, bv, window_size):
    """Pure-JAX replica of the PyTorch loop, for verification."""
    B, L, E = x.shape
    q = x @ wq + bq
    k = x @ wk + bk
    v = x @ wv + bv
    outs = []
    for i in range(L):
        start = max(0, i - window_size)
        end = min(L, i + window_size + 1)
        lq = q[:, i:i + 1, :]                       # (B, 1, E)
        lk = k[:, start:end, :]                     # (B, W, E)
        lv = v[:, start:end, :]                     # (B, W, E)
        scores = jnp.einsum('bqe,bke->bqk', lq, lk) / (E ** 0.5)
        probs = jax.nn.softmax(scores, axis=-1)
        outs.append(jnp.einsum('bqk,bke->bqe', probs, lv)[:, 0, :])
    return jnp.stack(outs, axis=1)


if __name__ == "__main__":
    B, L, E = 2, 8, 32
    window_size = 2

    key = jax.random.PRNGKey(0)
    kx, kq, kbq, kk, kbk, kv_, kbv = jax.random.split(key, 7)

    bound = 1.0 / (E ** 0.5)
    x = jax.random.normal(kx, (B, L, E), dtype=jnp.float32)
    # Weights stored pre-transposed: [E_in, E_out].
    wq = jax.random.uniform(kq, (E, E), jnp.float32, -bound, bound)
    bq = jax.random.uniform(kbq, (1, E), jnp.float32, -bound, bound)
    wk = jax.random.uniform(kk, (E, E), jnp.float32, -bound, bound)
    bk = jax.random.uniform(kbk, (1, E), jnp.float32, -bound, bound)
    wv = jax.random.uniform(kv_, (E, E), jnp.float32, -bound, bound)
    bv = jax.random.uniform(kbv, (1, E), jnp.float32, -bound, bound)

    ref = _reference_local_attention(x, wq, bq, wk, bk, wv, bv, window_size)

    # f32-operand run: tight parity with the reference.
    w32, b32 = fuse_qkv_params(wq, bq, wk, bk, wv, bv, param_dtype=jnp.float32)
    out32 = jax.block_until_ready(
        local_attention(x, w32, b32, window_size=window_size))
    assert out32.shape == (B, L, E)
    assert jnp.allclose(out32, ref, atol=2e-3, rtol=2e-3), "f32 mismatch vs reference"

    # Default bf16-operand run (MXU-native on v5e/v6e/v7x): looser tolerance for
    # the bf16 rounding of q/k/v and the fused weight.
    wbf, bbf = fuse_qkv_params(wq, bq, wk, bk, wv, bv)
    outbf = jax.block_until_ready(
        local_attention(x, wbf, bbf, window_size=window_size))
    assert outbf.shape == (B, L, E)
    assert jnp.allclose(outbf, ref, atol=5e-2, rtol=5e-2), "bf16 mismatch vs reference"

    print("KERNEL_OK")
</pallas_src>

<mosaic_0001>
module attributes {stable_mosaic.version = 11 : i64} {
  func.func @_qkv_proj_kernel(%arg0: i32, %arg1: i32, %arg2: memref<1x8x32xf32, #tpu.memory_space<vmem>>, %arg3: memref<32x96xf32, #tpu.memory_space<vmem>>, %arg4: memref<1x96xf32, #tpu.memory_space<vmem>>, %arg5: memref<1x8x32xf32, #tpu.memory_space<vmem>>, %arg6: memref<1x8x32xf32, #tpu.memory_space<vmem>>, %arg7: memref<1x8x32xf32, #tpu.memory_space<vmem>>) attributes {dimension_semantics = [#tpu.dimension_semantics<parallel>, #tpu.dimension_semantics<parallel>], iteration_bounds = array<i64: 2, 1>, scalar_prefetch = 0 : i64, scratch_operands = 0 : i64, tpu.core_type = #tpu.core_type<tc>, window_params = [{transform_indices = @transform_0, window_bounds = array<i64: 1, 8, 32>}, {pipeline_mode = #tpu.pipeline_mode<synchronous>, transform_indices = @transform_1, window_bounds = array<i64: 32, 96>}, {pipeline_mode = #tpu.pipeline_mode<synchronous>, transform_indices = @transform_2, window_bounds = array<i64: 1, 96>}, {transform_indices = @transform_3, window_bounds = array<i64: 1, 8, 32>}, {transform_indices = @transform_4, window_bounds = array<i64: 1, 8, 32>}, {transform_indices = @transform_5, window_bounds = array<i64: 1, 8, 32>}]} {
    %c0 = arith.constant 0 : index
    %c0_0 = arith.constant 0 : index
    %c0_1 = arith.constant 0 : index
    %0 = vector.load %arg2[%c0, %c0_0, %c0_1] : memref<1x8x32xf32, #tpu.memory_space<vmem>>, vector<1x8x32xf32>
    %1 = vector.shape_cast %0 : vector<1x8x32xf32> to vector<8x32xf32>
    %c0_2 = arith.constant 0 : index
    %c0_3 = arith.constant 0 : index
    %2 = vector.load %arg3[%c0_2, %c0_3] : memref<32x96xf32, #tpu.memory_space<vmem>>, vector<32x96xf32>
    %cst = arith.constant dense<0.000000e+00> : vector<8x96xf32>
    %3 = tpu.matmul %1, %2, %cst {dimension_numbers = #tpu.dot_dimension_numbers<[1], [0], [0], [1], [0, 0, 1, 1], [], []>} : vector<8x32xf32>, vector<32x96xf32>, vector<8x96xf32> -> vector<8x96xf32>
    %c0_4 = arith.constant 0 : index
    %c0_5 = arith.constant 0 : index
    %4 = vector.load %arg4[%c0_4, %c0_5] : memref<1x96xf32, #tpu.memory_space<vmem>>, vector<1x96xf32>
    %5 = vector.broadcast %4 : vector<1x96xf32> to vector<8x96xf32>
    %6 = arith.addf %3, %5 : vector<8x96xf32>
    %7 = vector.extract_strided_slice %6 {offsets = [0, 0], sizes = [8, 32], strides = [1, 1]} : vector<8x96xf32> to vector<8x32xf32>
    %c0_6 = arith.constant 0 : index
    %c0_7 = arith.constant 0 : index
    %c0_8 = arith.constant 0 : index
    %8 = vector.load %arg5[%c0_6, %c0_7, %c0_8] : memref<1x8x32xf32, #tpu.memory_space<vmem>>, vector<1x8x32xf32>
    %9 = vector.shape_cast %8 : vector<1x8x32xf32> to vector<8x32xf32>
    %10 = vector.shape_cast %7 : vector<8x32xf32> to vector<1x8x32xf32>
    tpu.vector_store %arg5[%c0_6, %c0_7, %c0_8], %10 {strides = array<i32>} : memref<1x8x32xf32, #tpu.memory_space<vmem>>, vector<1x8x32xf32>,
    %11 = vector.extract_strided_slice %6 {offsets = [0, 32], sizes = [8, 32], strides = [1, 1]} : vector<8x96xf32> to vector<8x32xf32>
    %c0_9 = arith.constant 0 : index
    %c0_10 = arith.constant 0 : index
    %c0_11 = arith.constant 0 : index
    %12 = vector.load %arg6[%c0_9, %c0_10, %c0_11] : memref<1x8x32xf32, #tpu.memory_space<vmem>>, vector<1x8x32xf32>
    %13 = vector.shape_cast %12 : vector<1x8x32xf32> to vector<8x32xf32>
    %14 = vector.shape_cast %11 : vector<8x32xf32> to vector<1x8x32xf32>
    tpu.vector_store %arg6[%c0_9, %c0_10, %c0_11], %14 {strides = array<i32>} : memref<1x8x32xf32, #tpu.memory_space<vmem>>, vector<1x8x32xf32>,
    %15 = vector.extract_strided_slice %6 {offsets = [0, 64], sizes = [8, 32], strides = [1, 1]} : vector<8x96xf32> to vector<8x32xf32>
    %c0_12 = arith.constant 0 : index
    %c0_13 = arith.constant 0 : index
    %c0_14 = arith.constant 0 : index
    %16 = vector.load %arg7[%c0_12, %c0_13, %c0_14] : memref<1x8x32xf32, #tpu.memory_space<vmem>>, vector<1x8x32xf32>
    %17 = vector.shape_cast %16 : vector<1x8x32xf32> to vector<8x32xf32>
    %18 = vector.shape_cast %15 : vector<8x32xf32> to vector<1x8x32xf32>
    tpu.vector_store %arg7[%c0_12, %c0_13, %c0_14], %18 {strides = array<i32>} : memref<1x8x32xf32, #tpu.memory_space<vmem>>, vector<1x8x32xf32>,
    return
  }
  func.func @transform_0(%arg0: i32, %arg1: i32) -> (i32, i32, i32) {
    %c0_i32 = arith.constant 0 : i32
    %c0_i32_0 = arith.constant 0 : i32
    return %arg0, %arg1, %c0_i32 : i32, i32, i32
  }
  func.func @transform_1(%arg0: i32, %arg1: i32) -> (i32, i32) {
    %c0_i32 = arith.constant 0 : i32
    %c0_i32_0 = arith.constant 0 : i32
    %c0_i32_1 = arith.constant 0 : i32
    return %c0_i32, %c0_i32_0 : i32, i32
  }
  func.func @transform_2(%arg0: i32, %arg1: i32) -> (i32, i32) {
    %c0_i32 = arith.constant 0 : i32
    %c0_i32_0 = arith.constant 0 : i32
    %c0_i32_1 = arith.constant 0 : i32
    return %c0_i32, %c0_i32_0 : i32, i32
  }
  func.func @transform_3(%arg0: i32, %arg1: i32) -> (i32, i32, i32) {
    %c0_i32 = arith.constant 0 : i32
    %c0_i32_0 = arith.constant 0 : i32
    return %arg0, %arg1, %c0_i32 : i32, i32, i32
  }
  func.func @transform_4(%arg0: i32, %arg1: i32) -> (i32, i32, i32) {
    %c0_i32 = arith.constant 0 : i32
    %c0_i32_0 = arith.constant 0 : i32
    return %arg0, %arg1, %c0_i32 : i32, i32, i32
  }
  func.func @transform_5(%arg0: i32, %arg1: i32) -> (i32, i32, i32) {
    %c0_i32 = arith.constant 0 : i32
    %c0_i32_0 = arith.constant 0 : i32
    return %arg0, %arg1, %c0_i32 : i32, i32, i32
  }
}

</mosaic_0001>

<llo_original>
// kernel: tpu_custom_call.1
$region0: #{tpu_custom_call.1}
  #allocation0 [shape = 'u32[]', space=smem, size = 0x4, offset = 0x4, fixed_abs, tag = 'smem constant byte address 0x4 - core index']
  #allocation1 [shape = 'u32[144,128]{1,0:T(1,128)}', space=vmem, size = 0x12000, scoped, tag = 'internal scratch']
  %s0 = inlined_call_operand.hbm [shape: f32[2,8,32], index: 0, kind: input, shape index: {}]
  %s1 = inlined_call_operand.hbm [shape: f32[32,96], index: 1, kind: input, shape index: {}]
  %s2 = inlined_call_operand.vmem [shape: f32[1,96], index: 2, kind: input, shape index: {}]
  %s3 = inlined_call_operand.hbm [shape: f32[2,8,32], index: 3, kind: output, shape index: {0}]
  %s4 = inlined_call_operand.hbm [shape: f32[2,8,32], index: 4, kind: output, shape index: {1}]
  %s5 = inlined_call_operand.hbm [shape: f32[2,8,32], index: 5, kind: output, shape index: {2}]
  %6 = xla_tuple %s3, %s4, %s5
  %s7 = sld [smem:[#allocation0]]
  $region69: #{tpu_custom_call.1} parent=0
    _
  %s9 = ssub.s32 1, %s7
  %s10 = scalar_select 0, %s9, %s7
  $region1: #{tpu_custom_call.1} parent=0
    #allocation2 [shape = 'u8[8192]{0}', space=vmem, size = 0x2000, scoped, tag = 'input window, operand 0']
    #allocation3 [shape = 's32[2]{0}', space=sflag, size = 0x8, scoped, tag = 'scoped memory for tpu_custom_call.1']
    #allocation4 [shape = 's32[2]{0}', space=sflag, size = 0x8, scoped, tag = 'scoped memory for tpu_custom_call.1']
    #allocation5 [shape = 'u8[16384]{0}', space=vmem, size = 0x4000, scoped, tag = 'input window, operand 1, single buffered']
    #allocation6 [shape = 's32[1]{0}', space=sflag, size = 0x4, scoped, tag = 'scoped memory for tpu_custom_call.1']
    #allocation7 [shape = 'u8[8192]{0}', space=vmem, size = 0x2000, scoped, tag = 'output window, operand 0']
    #allocation8 [shape = 'u8[8192]{0}', space=vmem, size = 0x2000, scoped, tag = 'output window, operand 1']
    #allocation9 [shape = 's32[2]{0}', space=sflag, size = 0x8, scoped, tag = 'scoped memory for tpu_custom_call.1']
    #allocation10 [shape = 'u8[8192]{0}', space=vmem, size = 0x2000, scoped, tag = 'output window, operand 2']
    %11 = vsyncpa [#allocation3], 0
    %s12 = scalar_lea.sflag [#allocation3], 1
    %13 = vsyncpa %s12, 0
    %14 = vsyncpa [#allocation6], 0
    %15 = vsyncpa [#allocation4], 0
    %s16 = scalar_lea.sflag [#allocation4], 1
    %17 = vsyncpa %s16, 0
    %18 = vsyncpa [#allocation9], 0
    %s19 = scalar_lea.sflag [#allocation9], 1
    %20 = vsyncpa %s19, 0
    loop: start=0, step=1, limit=4
    $region2: #{tpu_custom_call.1} parent=1 // loop_pre_header
      _
    $region3: #{tpu_custom_call.1} parent=1 // loop_header
      %s22 = sphi 0, %s26
      %p23 = scmp.ge.s32.totalorder %s22, 4
      %s29 = sphi 0, %s41
      %s30 = sphi 0, %s37
      %s31 = sphi 0, %s29
      %s32 = sphi 0, %s30
      %s33 = sphi 0, %s31
      %s34 = sphi 0, %s32
      %s46 = sphi 0, %s48
      %s49 = sphi 0, %s46
      %s50 = sphi 0, %s49
      %s66 = sphi 0, %s50
      %s70 = sphi 0, %s70
      %s72 = sphi 0, %s70
      %s73 = sphi 0, %s72
      %s87 = sphi 0, %s73
      %s91 = sphi 0, %s91
      %s93 = sphi 0, %s91
      %s94 = sphi 0, %s93
      %s108 = sphi 0, %s94
      %s116 = sphi 0, %s118
      %s119 = sphi 0, %s116
      %s120 = sphi 0, %s119
      %s136 = sphi 0, %s120
      %s144 = sphi 0, %s146
      %s147 = sphi 0, %s144
      %s148 = sphi 0, %s147
      %s164 = sphi 0, %s148
      %s172 = sphi 0, %s174
      %s175 = sphi 0, %s172
      %s176 = sphi 0, %s175
      %s192 = sphi 0, %s176
    $region4: #{tpu_custom_call.1} parent=1 // loop_header_branch
      %25 = sbr.rel (%p23) target = $region8
    $region5: #{tpu_custom_call.1} parent=1 // loop_body
      %s27 = ssub.s32 %s22, 1
      %s28 = ssub.s32 %s22, 2
      %s35 = sadd.s32 1, %s30
      %p36 = scmp.ge.s32.totalorder %s35, 1
      %s37 = scalar_select %p36, 0, %s35
      %s38 = sadd.s32 1, %s29
      %s39 = scalar_select %p36, %s38, %s29
      %p40 = scmp.ge.s32.totalorder %s39, 2
      %s41 = scalar_select %p40, 0, %s39
      %s42 = ssub.s32 %s29, %s41
      %s43 = ssub.s32 %s30, %s37
      %s44 = sor.u32 %s42, %s43
      %p45 = scmp.eq.s32.totalorder %s44, 0
      %s47 = sadd.s32 %s46, 1
      %s48 = scalar_select %p45, %s46, %s47
      %p51 = pneg %p45
      %p52 = scmp.eq.s32.totalorder %s22, 1
      %p53 = por %p51, %p52
      %p54 = scmp.ne.s32.totalorder %s46, %s49
      %p55 = scmp.eq.s32.totalorder %s22, 0
      %p56 = por %p54, %p55
      %p57 = scmp.ne.s32.totalorder %s46, %s49
      %p58 = scmp.eq.s32.totalorder %s27, 1
      %p59 = por %p57, %p58
      %p60 = scmp.ne.s32.totalorder %s49, %s50
      %p61 = scmp.eq.s32.totalorder %s27, 0
      %p62 = por %p60, %p61
      %p63 = scmp.ne.s32.totalorder %s49, %s50
      %p64 = scmp.eq.s32.totalorder %s28, 1
      %p65 = por %p63, %p64
      %p67 = scmp.ne.s32.totalorder %s50, %s66
      %p68 = scmp.eq.s32.totalorder %s28, 0
      %p69 = por %p67, %p68
      %s71 = sadd.s32 %s70, 1
      %p74 = scmp.eq.s32.totalorder %s22, 1
      %p75 = scmp.ne.s32.totalorder %s70, %s72
      %p76 = scmp.eq.s32.totalorder %s22, 0
      %p77 = por %p75, %p76
      %p78 = scmp.ne.s32.totalorder %s70, %s72
      %p79 = scmp.eq.s32.totalorder %s27, 1
      %p80 = por %p78, %p79
      %p81 = scmp.ne.s32.totalorder %s72, %s73
      %p82 = scmp.eq.s32.totalorder %s27, 0
      %p83 = por %p81, %p82
      %p84 = scmp.ne.s32.totalorder %s72, %s73
      %p85 = scmp.eq.s32.totalorder %s28, 1
      %p86 = por %p84, %p85
      %p88 = scmp.ne.s32.totalorder %s73, %s87
      %p89 = scmp.eq.s32.totalorder %s28, 0
      %p90 = por %p88, %p89
      %s92 = sadd.s32 %s91, 1
      %p95 = scmp.eq.s32.totalorder %s22, 1
      %p96 = scmp.ne.s32.totalorder %s91, %s93
      %p97 = scmp.eq.s32.totalorder %s22, 0
      %p98 = por %p96, %p97
      %p99 = scmp.ne.s32.totalorder %s91, %s93
      %p100 = scmp.eq.s32.totalorder %s27, 1
      %p101 = por %p99, %p100
      %p102 = scmp.ne.s32.totalorder %s93, %s94
      %p103 = scmp.eq.s32.totalorder %s27, 0
      %p104 = por %p102, %p103
      %p105 = scmp.ne.s32.totalorder %s93, %s94
      %p106 = scmp.eq.s32.totalorder %s28, 1
      %p107 = por %p105, %p106
      %p109 = scmp.ne.s32.totalorder %s94, %s108
      %p110 = scmp.eq.s32.totalorder %s28, 0
      %p111 = por %p109, %p110
      %s112 = ssub.s32 %s29, %s41
      %s113 = ssub.s32 %s30, %s37
      %s114 = sor.u32 %s112, %s113
      %p115 = scmp.eq.s32.totalorder %s114, 0
      %s117 = sadd.s32 %s116, 1
      %s118 = scalar_select %p115, %s116, %s117
      %p121 = pneg %p115
      %p122 = scmp.eq.s32.totalorder %s22, 1
      %p123 = por %p121, %p122
      %p124 = scmp.ne.s32.totalorder %s116, %s119
      %p125 = scmp.eq.s32.totalorder %s22, 0
      %p126 = por %p124, %p125
      %p127 = scmp.ne.s32.totalorder %s116, %s119
      %p128 = scmp.eq.s32.totalorder %s27, 1
      %p129 = por %p127, %p128
      %p130 = scmp.ne.s32.totalorder %s119, %s120
      %p131 = scmp.eq.s32.totalorder %s27, 0
      %p132 = por %p130, %p131
      %p133 = scmp.ne.s32.totalorder %s119, %s120
      %p134 = scmp.eq.s32.totalorder %s28, 1
      %p135 = por %p133, %p134
      %p137 = scmp.ne.s32.totalorder %s120, %s136
      %p138 = scmp.eq.s32.totalorder %s28, 0
      %p139 = por %p137, %p138
      %s140 = ssub.s32 %s29, %s41
      %s141 = ssub.s32 %s30, %s37
      %s142 = sor.u32 %s140, %s141
      %p143 = scmp.eq.s32.totalorder %s142, 0
      %s145 = sadd.s32 %s144, 1
      %s146 = scalar_select %p143, %s144, %s145
      %p149 = pneg %p143
      %p150 = scmp.eq.s32.totalorder %s22, 1
      %p151 = por %p149, %p150
      %p152 = scmp.ne.s32.totalorder %s144, %s147
      %p153 = scmp.eq.s32.totalorder %s22, 0
      %p154 = por %p152, %p153
      %p155 = scmp.ne.s32.totalorder %s144, %s147
      %p156 = scmp.eq.s32.totalorder %s27, 1
      %p157 = por %p155, %p156
      %p158 = scmp.ne.s32.totalorder %s147, %s148
      %p159 = scmp.eq.s32.totalorder %s27, 0
      %p160 = por %p158, %p159
      %p161 = scmp.ne.s32.totalorder %s147, %s148
      %p162 = scmp.eq.s32.totalorder %s28, 1
      %p163 = por %p161, %p162
      %p165 = scmp.ne.s32.totalorder %s148, %s164
      %p166 = scmp.eq.s32.totalorder %s28, 0
      %p167 = por %p165, %p166
      %s168 = ssub.s32 %s29, %s41
      %s169 = ssub.s32 %s30, %s37
      %s170 = sor.u32 %s168, %s169
      %p171 = scmp.eq.s32.totalorder %s170, 0
      %s173 = sadd.s32 %s172, 1
      %s174 = scalar_select %p171, %s172, %s173
      %p177 = pneg %p171
      %p178 = scmp.eq.s32.totalorder %s22, 1
      %p179 = por %p177, %p178
      %p180 = scmp.ne.s32.totalorder %s172, %s175
      %p181 = scmp.eq.s32.totalorder %s22, 0
      %p182 = por %p180, %p181
      %p183 = scmp.ne.s32.totalorder %s172, %s175
      %p184 = scmp.eq.s32.totalorder %s27, 1
      %p185 = por %p183, %p184
      %p186 = scmp.ne.s32.totalorder %s175, %s176
      %p187 = scmp.eq.s32.totalorder %s27, 0
      %p188 = por %p186, %p187
      %p189 = scmp.ne.s32.totalorder %s175, %s176
      %p190 = scmp.eq.s32.totalorder %s28, 1
      %p191 = por %p189, %p190
      %p193 = scmp.ne.s32.totalorder %s176, %s192
      %p194 = scmp.eq.s32.totalorder %s28, 0
      %p195 = por %p193, %p194
      %p196 = scmp.le.s32.totalorder 1, %s22
      %p197 = scmp.lt.s32.totalorder %s22, 3
      %p198 = pnand %p196, %p197
      %p199 = pneg %p198
      // Predicated region
      $region9: #{tpu_custom_call.1} parent=5 // pred_check
        _
      $region10: #{tpu_custom_call.1} parent=5 // pred_check_branch
        %201 = sbr.rel (%p198) target = $region12
      $region11: #{tpu_custom_call.1} parent=5 // pred_region
        %s202 = ssub.s32 %s22, 1
        // Predicated region
        $region13: #{tpu_custom_call.1} parent=11 // pred_check
          %p203 = pneg %p83
        $region14: #{tpu_custom_call.1} parent=11 // pred_check_branch
          %205 = sbr.rel (%p203) target = $region16
        $region15: #{tpu_custom_call.1} parent=11 // pred_region
          %s207 = ssub.s32 512, 512
          %208 = vsyncadd [#allocation6], %s207
          %s209 = sshll.u32 [#allocation5], 4
          %s210 = int_to_ptr.vmem [resolvable:$true] %s209
          %215 = dma.hbm_to_vmem [thread:$0]  %s1, 512, %s210, [#allocation6], 128, 128, 8
        $region16: #{tpu_custom_call.1} parent=11 // pred_fallthru
          _
        // Predicated region
        $region17: #{tpu_custom_call.1} parent=11 // pred_check
          %p216 = pneg %p104
        $region18: #{tpu_custom_call.1} parent=11 // pred_check_branch
          %218 = sbr.rel (%p216) target = $region20
        $region19: #{tpu_custom_call.1} parent=11 // pred_region
          _
        $region20: #{tpu_custom_call.1} parent=11 // pred_fallthru
          _
      $region12: #{tpu_custom_call.1} parent=5 // pred_fallthru
        _
      %p219 = scmp.lt.s32.totalorder %s22, 2
      // Predicated region
      $region21: #{tpu_custom_call.1} parent=5 // pred_check
        %p220 = pneg %p219
      $region22: #{tpu_custom_call.1} parent=5 // pred_check_branch
        %222 = sbr.rel (%p220) target = $region24
      $region23: #{tpu_custom_call.1} parent=5 // pred_region
        // Predicated region
        $region25: #{tpu_custom_call.1} parent=23 // pred_check
          %p223 = pneg %p56
        $region26: #{tpu_custom_call.1} parent=23 // pred_check_branch
          %225 = sbr.rel (%p223) target = $region28
        $region27: #{tpu_custom_call.1} parent=23 // pred_region
          %s226 = sand.u32 %s46, 1
          %s227 = scalar_lea.sflag [#allocation3], %s226
          %s228 = sand.u32 %s46, 1
          %s229 = smul.addr %s228, 8
          %s230 = scalar_lea.vmem [#allocation2], %s229
          %s232 = ssub.s32 128, 128
          %233 = vsyncadd %s227, %s232
          %s234 = sadd.s32 %s30, %s29
          %s235 = smul.addr %s234, 128
          %s236 = scalar_lea.hbm %s0, %s235
          %s238 = sshll.u32 %s230, 4
          %s239 = int_to_ptr.vmem [resolvable:$true] %s238
          %241 = dma.hbm_to_vmem [thread:$0]  %s236, 128, %s239, %s227
        $region28: #{tpu_custom_call.1} parent=23 // pred_fallthru
          _
      $region24: #{tpu_custom_call.1} parent=5 // pred_fallthru
        _
      %p242 = scmp.le.s32.totalorder 1, %s22
      %p243 = scmp.lt.s32.totalorder %s22, 3
      %p244 = pnand %p242, %p243
      %p245 = pneg %p244
      // Predicated region
      $region29: #{tpu_custom_call.1} parent=5 // pred_check
        _
      $region30: #{tpu_custom_call.1} parent=5 // pred_check_branch
        %247 = sbr.rel (%p244) target = $region32
      $region31: #{tpu_custom_call.1} parent=5 // pred_region
        %s248 = ssub.s32 %s22, 1
        %s249 = sand.u32 %s49, 1
        %s250 = scalar_lea.sflag [#allocation3], %s249
        %s251 = sand.u32 %s49, 1
        %s252 = smul.addr %s251, 8
        %s253 = scalar_lea.vmem [#allocation2], %s252
        // Predicated region
        $region33: #{tpu_custom_call.1} parent=31 // pred_check
          %p254 = pneg %p62
        $region34: #{tpu_custom_call.1} parent=31 // pred_check_branch
          %256 = sbr.rel (%p254) target = $region36
        $region35: #{tpu_custom_call.1} parent=31 // pred_region
          %257 = dma.done %s250, 128
        $region36: #{tpu_custom_call.1} parent=31 // pred_fallthru
          _
        // Predicated region
        $region37: #{tpu_custom_call.1} parent=31 // pred_check
          %p258 = pneg %p83
        $region38: #{tpu_custom_call.1} parent=31 // pred_check_branch
          %260 = sbr.rel (%p258) target = $region40
        $region39: #{tpu_custom_call.1} parent=31 // pred_region
          %261 = dma.done [#allocation6], 512
        $region40: #{tpu_custom_call.1} parent=31 // pred_fallthru
          _
        %s262 = sand.u32 %s49, 1
        %s263 = scalar_lea.sflag [#allocation3], %s262
        %s264 = sand.u32 %s49, 1
        %s265 = smul.addr %s264, 8
        %s266 = scalar_lea.vmem [#allocation2], %s265
        %p267 = pneg %p62
        %p268 = pneg %p59
        %p269 = pneg %p83
        %p270 = pneg %p80
        %p271 = pneg %p104
        %p272 = pneg %p101
        %p273 = pneg %p132
        %p274 = pneg %p129
        %s275 = sand.u32 %s119, 1
        %s276 = scalar_lea.sflag [#allocation4], %s275
        %s277 = sand.u32 %s119, 1
        %s278 = smul.addr %s277, 8
        %s279 = scalar_lea.vmem [#allocation7], %s278
        %p280 = pneg %p160
        %p281 = pneg %p157
        %s282 = sand.u32 %s27, 1
        %s283 = scalar_lea.sflag [#allocation9], %s282
        %s284 = sand.u32 %s147, 1
        %s285 = smul.addr %s284, 8
        %s286 = scalar_lea.vmem [#allocation8], %s285
        %p287 = pneg %p188
        %p288 = pneg %p185
        %s289 = sand.u32 %s27, 1
        %s290 = scalar_lea.sflag [#allocation9], %s289
        %s291 = sand.u32 %s175, 1
        %s292 = smul.addr %s291, 8
        %s293 = scalar_lea.vmem [#allocation10], %s292
        %v294 = vld [vmem:[%s253] sm:$0xff]
        %v295 = vld [vmem:[#allocation5] sm:$0xff]
        %v296 = vld [vmem:[#allocation5 + $0x8] sm:$0xff]
        %v297 = vld [vmem:[#allocation5 + $0x10] sm:$0xff]
        %v298 = vld [vmem:[#allocation5 + $0x18] sm:$0xff]
        %v299 = vld [vmem:[%s2] sm:$0x1]
        %v301 = vlaneseq
        %v302 = vshrl.u32 %v301, 7
        %v303 = vsub.s32 0, %v302
        %v304 = vrot.slane %v299, %v303
        %vm306 = vcmask 261120
        %v308 = vsel %vm306, %v294, 0
        %310 = vmatprep.subr.mxu0 0.0
        %311 = vmatpush1.msra.mxu0 0.0
        %312 = vmatprep.subr.mxu0 0.0
        %313 = vmatpush1.msra.mxu0 0.0
        %314 = vmatprep.subr.mxu0 0.0
        %315 = vmatpush1.msra.mxu0 0.0
        %316 = vmatprep.subr.mxu0 0.0
        %317 = vmatpush1.msra.mxu0 0.0
        %318 = vmatprep.subr.mxu0 0.0
        %319 = vmatpush1.msra.mxu0 0.0
        %320 = vmatprep.subr.mxu0 0.0
        %321 = vmatpush1.msra.mxu0 0.0
        %322 = vmatprep.subr.mxu0 0.0
        %323 = vmatpush1.msra.mxu0 0.0
        %324 = vmatprep.subr.mxu0 0.0
        %325 = vmatpush1.msra.mxu0 0.0
        %326 = vmatprep.subr.mxu0 0.0
        %327 = vmatpush1.msra.mxu0 0.0
        %328 = vmatprep.subr.mxu0 0.0
        %329 = vmatpush1.msra.mxu0 0.0
        %330 = vmatprep.subr.mxu0 0.0
        %331 = vmatpush1.msra.mxu0 0.0
        %332 = vmatprep.subr.mxu0 0.0
        %333 = vmatpush1.msra.mxu0 0.0
        %334 = vmatprep.subr.mxu0 0.0
        %335 = vmatpush1.msra.mxu0 %v298
        %336 = vmatprep.subr.mxu0 0.0
        %337 = vmatpush1.msra.mxu0 %v297
        %338 = vmatprep.subr.mxu0 0.0
        %339 = vmatpush1.msra.mxu0 %v296
        %340 = vmatprep.subr.mxu0 0.0
        %341 = vmatpush1.msra.mxu0 %v295
        %342 = vmatprep.subr.mxu0 0.0
        %343 = vmatpush2.msra.mxu0 0.0
        %344 = vmatprep.subr.mxu0 0.0
        %345 = vmatpush2.msra.mxu0 0.0
        %346 = vmatprep.subr.mxu0 0.0
        %347 = vmatpush2.msra.mxu0 0.0
        %348 = vmatprep.subr.mxu0 0.0
        %349 = vmatpush2.msra.mxu0 0.0
        %350 = vmatprep.subr.mxu0 0.0
        %351 = vmatpush2.msra.mxu0 0.0
        %352 = vmatprep.subr.mxu0 0.0
        %353 = vmatpush2.msra.mxu0 0.0
        %354 = vmatprep.subr.mxu0 0.0
        %355 = vmatpush2.msra.mxu0 0.0
        %356 = vmatprep.subr.mxu0 0.0
        %357 = vmatpush2.msra.mxu0 0.0
        %358 = vmatprep.subr.mxu0 0.0
        %359 = vmatpush2.msra.mxu0 0.0
        %360 = vmatprep.subr.mxu0 0.0
        %361 = vmatpush2.msra.mxu0 0.0
        %362 = vmatprep.subr.mxu0 0.0
        %363 = vmatpush2.msra.mxu0 0.0
        %364 = vmatprep.subr.mxu0 0.0
        %365 = vmatpush2.msra.mxu0 0.0
        %366 = vmatprep.subr.mxu0 0.0
        %367 = vmatpush2.msra.mxu0 0.0
        %368 = vmatprep.subr.mxu0 0.0
        %369 = vmatpush2.msra.mxu0 0.0
        %370 = vmatprep.subr.mxu0 0.0
        %371 = vmatpush2.msra.mxu0 0.0
        %372 = vmatprep.subr.mxu0 0.0
        %373 = vmatpush2.msra.mxu0 0.0
        %374 = vmatprep.mubr.f32.mxu0 0.0
        %375 = vmatmul.mubr.f32.gmra.mxu0 %v308
        %v376 = vpop.f32.mrf.mxu0
        %v377 = vadd.f32 %v304, %v376
        %v378 = vpop.f32.mrf.mxu0
        %379 = vdwg.mxu0
        %380 = vst.msk [vmem:[%s279] sm:$0xff] %vm306, %v377
        %382 = vrot.lane.b32.xlu0 %v377, 96
        %v383 = vpop.permute.xlu0 %382
        %385 = vst.msk [vmem:[%s286] sm:$0xff] %vm306, %v383
        %386 = vrot.lane.b32.xlu0 %v377, 64
        %v387 = vpop.permute.xlu0 %386
        %389 = vst.msk [vmem:[%s293] sm:$0xff] %vm306, %v387
        %s390 = sand.u32 %s119, 1
        %s391 = scalar_lea.sflag [#allocation4], %s390
        %s392 = sand.u32 %s119, 1
        %s393 = smul.addr %s392, 8
        %s394 = scalar_lea.vmem [#allocation7], %s393
        %s395 = sand.u32 %s27, 1
        %s396 = scalar_lea.sflag [#allocation9], %s395
        %s397 = sand.u32 %s147, 1
        %s398 = smul.addr %s397, 8
        %s399 = scalar_lea.vmem [#allocation8], %s398
        %s400 = sand.u32 %s27, 1
        %s401 = scalar_lea.sflag [#allocation9], %s400
        %s402 = sand.u32 %s175, 1
        %s403 = smul.addr %s402, 8
        %s404 = scalar_lea.vmem [#allocation10], %s403
        // Predicated region
        $region41: #{tpu_custom_call.1} parent=31 // pred_check
          %p405 = pneg %p129
        $region42: #{tpu_custom_call.1} parent=31 // pred_check_branch
          %407 = sbr.rel (%p405) target = $region44
        $region43: #{tpu_custom_call.1} parent=31 // pred_region
          %s409 = ssub.s32 128, 128
          %410 = vsyncadd %s391, %s409
          %s411 = sadd.s32 %s32, %s31
          %s412 = smul.addr %s411, 128
          %s413 = scalar_lea.hbm %s3, %s412
          %s415 = sshll.u32 %s394, 4
          %s416 = int_to_ptr.vmem [resolvable:$true] %s415
          %418 = dma.vmem_to_hbm [thread:$0]  %s416, 128, %s413, %s391
        $region44: #{tpu_custom_call.1} parent=31 // pred_fallthru
          _
        // Predicated region
        $region45: #{tpu_custom_call.1} parent=31 // pred_check
          %p419 = pneg %p157
        $region46: #{tpu_custom_call.1} parent=31 // pred_check_branch
          %421 = sbr.rel (%p419) target = $region48
        $region47: #{tpu_custom_call.1} parent=31 // pred_region
          %s423 = ssub.s32 128, 128
          %424 = vsyncadd %s396, %s423
          %s425 = sadd.s32 %s32, %s31
          %s426 = smul.addr %s425, 128
          %s427 = scalar_lea.hbm %s4, %s426
          %s429 = sshll.u32 %s399, 4
          %s430 = int_to_ptr.vmem [resolvable:$true] %s429
          %432 = dma.vmem_to_hbm [thread:$0]  %s430, 128, %s427, %s396
        $region48: #{tpu_custom_call.1} parent=31 // pred_fallthru
          _
        // Predicated region
        $region49: #{tpu_custom_call.1} parent=31 // pred_check
          %p433 = pneg %p185
        $region50: #{tpu_custom_call.1} parent=31 // pred_check_branch
          %435 = sbr.rel (%p433) target = $region52
        $region51: #{tpu_custom_call.1} parent=31 // pred_region
          %s437 = ssub.s32 128, 128
          %438 = vsyncadd %s401, %s437
          %s439 = sadd.s32 %s32, %s31
          %s440 = smul.addr %s439, 128
          %s441 = scalar_lea.hbm %s5, %s440
          %s443 = sshll.u32 %s404, 4
          %s444 = int_to_ptr.vmem [resolvable:$true] %s443
          %446 = dma.vmem_to_hbm [thread:$0]  %s444, 128, %s441, %s401
        $region52: #{tpu_custom_call.1} parent=31 // pred_fallthru
          _
      $region32: #{tpu_custom_call.1} parent=5 // pred_fallthru
        _
      %p447 = scmp.le.s32.totalorder 2, %s22
      // Predicated region
      $region53: #{tpu_custom_call.1} parent=5 // pred_check
        %p448 = pneg %p447
      $region54: #{tpu_custom_call.1} parent=5 // pred_check_branch
        %450 = sbr.rel (%p448) target = $region56
      $region55: #{tpu_custom_call.1} parent=5 // pred_region
        %s451 = ssub.s32 %s22, 2
        // Predicated region
        $region57: #{tpu_custom_call.1} parent=55 // pred_check
          %p452 = pneg %p135
        $region58: #{tpu_custom_call.1} parent=55 // pred_check_branch
          %454 = sbr.rel (%p452) target = $region60
        $region59: #{tpu_custom_call.1} parent=55 // pred_region
          %s455 = sand.u32 %s120, 1
          %s456 = scalar_lea.sflag [#allocation4], %s455
          %s457 = sand.u32 %s120, 1
          %s458 = smul.addr %s457, 8
          %s459 = scalar_lea.vmem [#allocation7], %s458
          %460 = dma.done %s456, 128
        $region60: #{tpu_custom_call.1} parent=55 // pred_fallthru
          _
        // Predicated region
        $region61: #{tpu_custom_call.1} parent=55 // pred_check
          %p461 = pneg %p163
        $region62: #{tpu_custom_call.1} parent=55 // pred_check_branch
          %463 = sbr.rel (%p461) target = $region64
        $region63: #{tpu_custom_call.1} parent=55 // pred_region
          %s464 = sand.u32 %s28, 1
          %s465 = scalar_lea.sflag [#allocation9], %s464
          %s466 = sand.u32 %s148, 1
          %s467 = smul.addr %s466, 8
          %s468 = scalar_lea.vmem [#allocation8], %s467
          %469 = dma.done %s465, 128
        $region64: #{tpu_custom_call.1} parent=55 // pred_fallthru
          _
        // Predicated region
        $region65: #{tpu_custom_call.1} parent=55 // pred_check
          %p470 = pneg %p191
        $region66: #{tpu_custom_call.1} parent=55 // pred_check_branch
          %472 = sbr.rel (%p470) target = $region68
        $region67: #{tpu_custom_call.1} parent=55 // pred_region
          %s473 = sand.u32 %s28, 1
          %s474 = scalar_lea.sflag [#allocation9], %s473
          %s475 = sand.u32 %s176, 1
          %s476 = smul.addr %s475, 8
          %s477 = scalar_lea.vmem [#allocation10], %s476
          %478 = dma.done %s474, 128
        $region68: #{tpu_custom_call.1} parent=55 // pred_fallthru
          _
      $region56: #{tpu_custom_call.1} parent=5 // pred_fallthru
        _
    $region6: #{tpu_custom_call.1} parent=1 // loop_footer
      %s26 = sadd.s32 1, %s22
    $region7: #{tpu_custom_call.1} parent=1 // loop_footer_branch
      %21 = sbr.rel target = $region3
    $region8: #{tpu_custom_call.1} parent=1 // loop_exit
      _
    %479 = vsyncpa [#allocation3], 1
    %s480 = scalar_lea.sflag [#allocation3], 1
    %481 = vsyncpa %s480, 1
    %482 = vsyncpa [#allocation6], 1
    %483 = vsyncpa [#allocation4], 1
    %s484 = scalar_lea.sflag [#allocation4], 1
    %485 = vsyncpa %s484, 1
    %486 = vsyncpa [#allocation9], 1
    %s487 = scalar_lea.sflag [#allocation9], 1
    %488 = vsyncpa %s487, 1

</llo_original>
